<compile_context>
chip_gen: v7x
topology: tpu7x:2x2x1
jax: 0.10.0
libtpu: 0.0.40
codegen_flags: <defaults>
</compile_context>

<pallas_src>
import functools

import jax
import jax.numpy as jnp
from jax.experimental import pallas as pl
from jax.experimental.pallas import tpu as pltpu

LN_EPS = 1e-5  # nn.LayerNorm default eps


# --------------------------------------------------------------------------
# Kernel
# --------------------------------------------------------------------------
def _glu_block_kernel(x_ref, w_ref, b_ref, o_ref, y_ref):
    """One (row-tile, col-block) grid step.

    x_ref: (TM, D)      input rows (resident across the inner j axis)
    w_ref: (D, 2*TN)    bf16 packed [gamma*Wc_j | gamma*Wg_j]
    b_ref: (1, 2*TN)    f32 packed  [beta@Wc_j  | beta@Wg_j ]
    o_ref: (TM, TN)     output column block
    y_ref: (TM, D)      bf16 scratch holding the normalized rows
    """
    j = pl.program_id(1)
    tn = o_ref.shape[-1]

    # LayerNorm once per row tile (j == 0), reused for every column block.
    @pl.when(j == 0)
    def _():
        x = x_ref[...].astype(jnp.float32)
        mean = jnp.mean(x, axis=-1, keepdims=True)
        mean_sq = jnp.mean(x * x, axis=-1, keepdims=True)
        var = mean_sq - mean * mean          # two independent XLU reductions
        y_ref[...] = ((x - mean) * jax.lax.rsqrt(var + LN_EPS)).astype(y_ref.dtype)

    # One MXU matmul per column block: bf16 operands, f32 accumulation.
    proj = jnp.dot(y_ref[...], w_ref[...], preferred_element_type=jnp.float32)
    proj = proj + b_ref[...]                 # folded LayerNorm beta

    c = proj[:, :tn]                         # lane-aligned split (tn % 128 == 0)
    g = proj[:, tn:]

    # Residual from the resident x tile; GLU gate; dropout == identity (p=0).
    col0 = pl.multiple_of(j * tn, 128)
    x_res = x_ref[:, pl.ds(col0, tn)].astype(jnp.float32)
    o_ref[...] = (x_res + c * jax.nn.sigmoid(g)).astype(o_ref.dtype)


# --------------------------------------------------------------------------
# One-time parameter packing (model-load time, NOT in the per-call jit path)
# --------------------------------------------------------------------------
def pack_glu_params(w_fc, gamma, beta, n_col_blocks=1, dtype=jnp.bfloat16):
    """Fold LayerNorm affine params into the projection and block the columns.

    w_fc:  (2*D, D)  PyTorch nn.Linear weight (rows: [Wc ; Wg]).
    Returns:
      w_packed: (n_col_blocks, D, 2*TN) dtype   = [gamma*Wc_j | gamma*Wg_j]
      bias:     (n_col_blocks, 1, 2*TN) float32 = [beta@Wc_j  | beta@Wg_j ]
    NOTE: repack whenever gamma/beta/w_fc change (training).
    """
    D = w_fc.shape[1]
    assert w_fc.shape[0] == 2 * D
    assert D % 128 == 0, "pad D to a multiple of 128 before packing"
    assert D % n_col_blocks == 0
    tn = D // n_col_blocks
    assert tn % 128 == 0, "per-block column width must be a multiple of 128"

    wc = w_fc[:D, :].astype(jnp.float32).T       # (D, D): y @ wc -> c
    wg = w_fc[D:, :].astype(jnp.float32).T       # (D, D): y @ wg -> g
    gcol = gamma.astype(jnp.float32)[:, None]
    wc_s, wg_s = wc * gcol, wg * gcol            # fold gamma into input rows
    bc = beta.astype(jnp.float32) @ wc           # fold beta into a bias
    bg = beta.astype(jnp.float32) @ wg

    w_blocks, b_blocks = [], []
    for jb in range(n_col_blocks):
        sl = slice(jb * tn, (jb + 1) * tn)
        w_blocks.append(jnp.concatenate([wc_s[:, sl], wg_s[:, sl]], axis=1))
        b_blocks.append(jnp.concatenate([bc[sl], bg[sl]], axis=0))
    w_packed = jnp.stack(w_blocks, axis=0).astype(dtype)
    bias = jnp.stack(b_blocks, axis=0).reshape(n_col_blocks, 1, 2 * tn)
    return w_packed, bias.astype(jnp.float32)


# --------------------------------------------------------------------------
# Static planning: row tile, column blocks, VMEM limit
# --------------------------------------------------------------------------
def _vmem_fits(tm, tn, dim, x_item, budget):
    w_bufs = 1 if tn == dim else 2               # single-buffered when constant
    w = w_bufs * dim * 2 * tn * 2                # bf16 weight block(s)
    xin = 2 * tm * dim * x_item                  # x tile, double-buffered
    out = 2 * tm * tn * x_item                   # out tile, double-buffered
    y = tm * dim * 2                             # bf16 LN scratch
    tmp = tm * dim * 4 + 3 * tm * 2 * tn * 4     # f32 upcast + proj/gate temps
    bias = 2 * 2 * tn * 4
    return (w + xin + out + y + tmp + bias) <= budget


def glu_block_plan(n_rows, dim, x_dtype=jnp.float32):
    """Pick (tile_rows, n_col_blocks, vmem_limit_bytes) for this generation."""
    assert dim % 128 == 0, "pad D to a multiple of 128"
    x_item = jnp.dtype(x_dtype).itemsize

    try:
        cap = int(pltpu.get_tpu_info().vmem_capacity_bytes)   # 64 MiB on v7x
    except Exception:
        cap = 64 << 20                                        # safe everywhere
    vmem_limit = max(24 << 20, min(cap - (8 << 20), int(cap * 0.8)))
    budget = int(vmem_limit * 0.85)

    # Row tile: MXU-native multiples of 256, scaled with D (~8-16 MiB target).
    if dim <= 512:
        tm = 1024
    elif dim <= 1024:
        tm = 512
    else:
        tm = 256
    if tm >= n_rows:
        tm = n_rows                       # single block == full extent, always legal

    # Column blocks: smallest count whose footprint fits the budget.
    n_cblk = 1
    while not _vmem_fits(tm, dim // n_cblk, dim, x_item, budget):
        nxt = n_cblk * 2
        if dim % nxt != 0 or (dim // nxt) % 128 != 0:
            break
        n_cblk = nxt
    while not _vmem_fits(tm, dim // n_cblk, dim, x_item, budget) and tm > 256:
        tm //= 2

    return {"tile_rows": int(tm),
            "n_col_blocks": int(n_cblk),
            "vmem_limit_bytes": int(vmem_limit)}


# --------------------------------------------------------------------------
# Forward
# --------------------------------------------------------------------------
@functools.partial(jax.jit, static_argnames=("tile_rows", "vmem_limit_bytes"))
def glu_block_forward(x, w_packed, bias, *, tile_rows, vmem_limit_bytes):
    """x: (..., D); w_packed/bias from pack_glu_params."""
    orig_shape = x.shape
    D = orig_shape[-1]
    n_cblk, d_w, two_tn = w_packed.shape
    tn = two_tn // 2
    assert d_w == D and n_cblk * tn == D
    assert D % 128 == 0 and tn % 128 == 0

    x2d = x.reshape(-1, D)
    N = x2d.shape[0]
    tm = min(tile_rows, N)
    grid = (pl.cdiv(N, tm), n_cblk)

    # Constant-index operands only when there is a single column block.
    if n_cblk == 1:
        w_spec = pl.BlockSpec((None, D, 2 * tn), lambda i, j: (j, 0, 0),
                              pipeline_mode=pl.Buffered(1))
        b_spec = pl.BlockSpec((None, 1, 2 * tn), lambda i, j: (j, 0, 0),
                              pipeline_mode=pl.Buffered(1))
    else:
        w_spec = pl.BlockSpec((None, D, 2 * tn), lambda i, j: (j, 0, 0))
        b_spec = pl.BlockSpec((None, 1, 2 * tn), lambda i, j: (j, 0, 0))

    out2d = pl.pallas_call(
        _glu_block_kernel,
        out_shape=jax.ShapeDtypeStruct((N, D), x.dtype),
        grid_spec=pltpu.PrefetchScalarGridSpec(
            num_scalar_prefetch=0,
            grid=grid,
            in_specs=[
                pl.BlockSpec((tm, D), lambda i, j: (i, 0)),   # x rows (resident over j)
                w_spec,                                       # packed weight block
                b_spec,                                       # packed bias block
            ],
            out_specs=pl.BlockSpec((tm, tn), lambda i, j: (i, j)),
            scratch_shapes=[pltpu.VMEM((tm, D), jnp.bfloat16)],  # normalized rows
        ),
        compiler_params=pltpu.CompilerParams(
            dimension_semantics=("parallel", "arbitrary"),
            vmem_limit_bytes=vmem_limit_bytes,
        ),
    )(x2d, w_packed, bias)

    return out2d.reshape(orig_shape)


# --------------------------------------------------------------------------
# Pure-JAX f32 reference mirroring the PyTorch forward
# --------------------------------------------------------------------------
def glu_block_reference(x, gamma, beta, w_fc):
    D = x.shape[-1]
    xf = x.astype(jnp.float32)
    mean = jnp.mean(xf, axis=-1, keepdims=True)
    var = jnp.mean((xf - mean) ** 2, axis=-1, keepdims=True)
    y = (xf - mean) / jnp.sqrt(var + LN_EPS)
    y = y * gamma.astype(jnp.float32) + beta.astype(jnp.float32)
    proj = y @ w_fc.astype(jnp.float32).T
    c, g = proj[..., :D], proj[..., D:]
    return (xf + c * jax.nn.sigmoid(g)).astype(x.dtype)


if __name__ == "__main__":
    key = jax.random.PRNGKey(0)
    k_x, k_w, k_g, k_b = jax.random.split(key, 4)

    # Small but lane-dense demo shapes (D = 128 = one full lane width).
    batch, seq, dim = 2, 8, 128
    x = jax.random.normal(k_x, (batch, seq, dim), dtype=jnp.float32)

    # Non-trivial LayerNorm affine params to exercise the gamma/beta folding.
    gamma = 1.0 + 0.1 * jax.random.normal(k_g, (dim,), dtype=jnp.float32)
    beta = 0.05 * jax.random.normal(k_b, (dim,), dtype=jnp.float32)
    w_fc = 0.02 * jax.random.normal(k_w, (2 * dim, dim), dtype=jnp.float32)

    # Plan tiles / VMEM once, pack parameters once (hoisted out of the jit path).
    n_rows = batch * seq
    plan = glu_block_plan(n_rows, dim, x_dtype=x.dtype)
    w_packed, bias = pack_glu_params(w_fc, gamma, beta,
                                     n_col_blocks=plan["n_col_blocks"])

    out = glu_block_forward(
        x, w_packed, bias,
        tile_rows=plan["tile_rows"],
        vmem_limit_bytes=plan["vmem_limit_bytes"])
    jax.block_until_ready(out)

    ref = glu_block_reference(x, gamma, beta, w_fc)
    assert out.shape == x.shape and out.dtype == x.dtype
    # bf16 matmul operands with f32 accumulation -> slightly looser tolerance
    # than the pure-f32 reference path.
    assert jnp.allclose(out, ref, atol=2e-2, rtol=2e-2), "mismatch vs reference"

    print("KERNEL_OK")
</pallas_src>

<mosaic_0001>
module attributes {stable_mosaic.version = 11 : i64} {
  func.func @_glu_block_kernel(%arg0: i32, %arg1: i32, %arg2: memref<16x128xf32, #tpu.memory_space<vmem>>, %arg3: memref<1x128x256xbf16, #tpu.memory_space<vmem>>, %arg4: memref<1x1x256xf32, #tpu.memory_space<vmem>>, %arg5: memref<16x128xf32, #tpu.memory_space<vmem>>, %arg6: memref<16x128xbf16, #tpu.memory_space<vmem>>) attributes {dimension_semantics = [#tpu.dimension_semantics<parallel>, #tpu.dimension_semantics<arbitrary>], iteration_bounds = array<i64: 1, 1>, scalar_prefetch = 0 : i64, scratch_operands = 1 : i64, tpu.core_type = #tpu.core_type<tc>, window_params = [{transform_indices = @transform_0, window_bounds = array<i64: 16, 128>}, {pipeline_mode = #tpu.pipeline_mode<synchronous>, transform_indices = @transform_1, window_bounds = array<i64: 1, 128, 256>}, {pipeline_mode = #tpu.pipeline_mode<synchronous>, transform_indices = @transform_2, window_bounds = array<i64: 1, 1, 256>}, {transform_indices = @transform_3, window_bounds = array<i64: 16, 128>}]} {
    %c0_i32 = arith.constant 0 : i32
    %0 = arith.cmpi eq, %arg1, %c0_i32 : i32
    %1 = arith.extui %0 : i1 to i32
    %c0_i32_0 = arith.constant 0 : i32
    %2 = arith.cmpi ne, %1, %c0_i32_0 : i32
    scf.if %2 {
      %c0_12 = arith.constant 0 : index
      %c0_13 = arith.constant 0 : index
      %25 = vector.load %arg2[%c0_12, %c0_13] : memref<16x128xf32, #tpu.memory_space<vmem>>, vector<16x128xf32>
      %cst_14 = arith.constant dense<0.000000e+00> : vector<16xf32>
      %26 = vector.multi_reduction <add>, %25, %cst_14 [1] : vector<16x128xf32> to vector<16xf32>
      %27 = vector.shape_cast %26 : vector<16xf32> to vector<16x1xf32>
      %cst_15 = arith.constant 1.280000e+02 : f32
      %28 = vector.broadcast %cst_15 : f32 to vector<16x1xf32>
      %29 = arith.divf %27, %28 : vector<16x1xf32>
      %30 = arith.mulf %25, %25 : vector<16x128xf32>
      %cst_16 = arith.constant dense<0.000000e+00> : vector<16xf32>
      %31 = vector.multi_reduction <add>, %30, %cst_16 [1] : vector<16x128xf32> to vector<16xf32>
      %32 = vector.shape_cast %31 : vector<16xf32> to vector<16x1xf32>
      %cst_17 = arith.constant 1.280000e+02 : f32
      %33 = vector.broadcast %cst_17 : f32 to vector<16x1xf32>
      %34 = arith.divf %32, %33 : vector<16x1xf32>
      %35 = arith.mulf %29, %29 : vector<16x1xf32>
      %36 = arith.subf %34, %35 : vector<16x1xf32>
      %37 = vector.broadcast %29 : vector<16x1xf32> to vector<16x128xf32>
      %38 = arith.subf %25, %37 : vector<16x128xf32>
      %cst_18 = arith.constant 9.99999974E-6 : f32
      %39 = vector.broadcast %cst_18 : f32 to vector<16x1xf32>
      %40 = arith.addf %36, %39 : vector<16x1xf32>
      %41 = math.rsqrt %40 : vector<16x1xf32>
      %42 = vector.broadcast %41 : vector<16x1xf32> to vector<16x128xf32>
      %43 = arith.mulf %38, %42 : vector<16x128xf32>
      %44 = arith.truncf %43 : vector<16x128xf32> to vector<16x128xbf16>
      %c0_19 = arith.constant 0 : index
      %c0_20 = arith.constant 0 : index
      %45 = vector.load %arg6[%c0_19, %c0_20] : memref<16x128xbf16, #tpu.memory_space<vmem>>, vector<16x128xbf16>
      tpu.vector_store %arg6[%c0_19, %c0_20], %44 {strides = array<i32>} : memref<16x128xbf16, #tpu.memory_space<vmem>>, vector<16x128xbf16>,
    } else {
    }
    %c0 = arith.constant 0 : index
    %c0_1 = arith.constant 0 : index
    %3 = vector.load %arg6[%c0, %c0_1] : memref<16x128xbf16, #tpu.memory_space<vmem>>, vector<16x128xbf16>
    %c0_2 = arith.constant 0 : index
    %c0_3 = arith.constant 0 : index
    %c0_4 = arith.constant 0 : index
    %4 = vector.load %arg3[%c0_2, %c0_3, %c0_4] : memref<1x128x256xbf16, #tpu.memory_space<vmem>>, vector<1x128x256xbf16>
    %5 = vector.shape_cast %4 : vector<1x128x256xbf16> to vector<128x256xbf16>
    %cst = arith.constant dense<0.000000e+00> : vector<16x256xf32>
    %6 = tpu.matmul %3, %5, %cst {dimension_numbers = #tpu.dot_dimension_numbers<[1], [0], [0], [1], [0, 0, 1, 1], [], []>} : vector<16x128xbf16>, vector<128x256xbf16>, vector<16x256xf32> -> vector<16x256xf32>
    %c0_5 = arith.constant 0 : index
    %c0_6 = arith.constant 0 : index
    %c0_7 = arith.constant 0 : index
    %7 = vector.load %arg4[%c0_5, %c0_6, %c0_7] : memref<1x1x256xf32, #tpu.memory_space<vmem>>, vector<1x1x256xf32>
    %8 = vector.shape_cast %7 : vector<1x1x256xf32> to vector<1x256xf32>
    %9 = vector.broadcast %8 : vector<1x256xf32> to vector<16x256xf32>
    %10 = arith.addf %6, %9 : vector<16x256xf32>
    %11 = vector.extract_strided_slice %10 {offsets = [0, 0], sizes = [16, 128], strides = [1, 1]} : vector<16x256xf32> to vector<16x128xf32>
    %12 = vector.extract_strided_slice %10 {offsets = [0, 128], sizes = [16, 128], strides = [1, 1]} : vector<16x256xf32> to vector<16x128xf32>
    %c128_i32 = arith.constant 128 : i32
    %13 = arith.muli %arg1, %c128_i32 : i32
    %14 = tpu.assume_multiple %13, 128 : i32
    %c0_8 = arith.constant 0 : index
    %15 = arith.index_cast %14 : i32 to index
    %16 = vector.load %arg2[%c0_8, %15] : memref<16x128xf32, #tpu.memory_space<vmem>>, vector<16x128xf32>
    %17 = arith.negf %12 : vector<16x128xf32>
    %18 = math.exp %17 : vector<16x128xf32>
    %cst_9 = arith.constant 1.000000e+00 : f32
    %19 = vector.broadcast %cst_9 : f32 to vector<16x128xf32>
    %20 = arith.addf %19, %18 : vector<16x128xf32>
    %21 = arith.divf %19, %20 : vector<16x128xf32>
    %22 = arith.mulf %11, %21 : vector<16x128xf32>
    %23 = arith.addf %16, %22 : vector<16x128xf32>
    %c0_10 = arith.constant 0 : index
    %c0_11 = arith.constant 0 : index
    %24 = vector.load %arg5[%c0_10, %c0_11] : memref<16x128xf32, #tpu.memory_space<vmem>>, vector<16x128xf32>
    tpu.vector_store %arg5[%c0_10, %c0_11], %23 {strides = array<i32>} : memref<16x128xf32, #tpu.memory_space<vmem>>, vector<16x128xf32>,
    return
  }
  func.func @transform_0(%arg0: i32, %arg1: i32) -> (i32, i32) {
    %c0_i32 = arith.constant 0 : i32
    %c0_i32_0 = arith.constant 0 : i32
    return %arg0, %c0_i32 : i32, i32
  }
  func.func @transform_1(%arg0: i32, %arg1: i32) -> (i32, i32, i32) {
    %c0_i32 = arith.constant 0 : i32
    %c0_i32_0 = arith.constant 0 : i32
    %c0_i32_1 = arith.constant 0 : i32
    return %arg1, %c0_i32, %c0_i32_0 : i32, i32, i32
  }
  func.func @transform_2(%arg0: i32, %arg1: i32) -> (i32, i32, i32) {
    %c0_i32 = arith.constant 0 : i32
    %c0_i32_0 = arith.constant 0 : i32
    %c0_i32_1 = arith.constant 0 : i32
    return %arg1, %c0_i32, %c0_i32_0 : i32, i32, i32
  }
  func.func @transform_3(%arg0: i32, %arg1: i32) -> (i32, i32) {
    %c0_i32 = arith.constant 0 : i32
    return %arg0, %arg1 : i32, i32
  }
}

</mosaic_0001>

<llo_original>
// kernel: glu_block_forward.1
$region0: #{glu_block_forward.1}
  #allocation0 [shape = 'u32[]', space=smem, size = 0x4, offset = 0x4, fixed_abs, tag = 'smem constant byte address 0x4 - core index']
  #allocation1 [shape = 'u32[144,128]{1,0:T(1,128)}', space=vmem, size = 0x12000, scoped, tag = 'internal scratch']
  #allocation2 [shape = 'bf16[16,128]{1,0:T(16,128)(2,1)}', space=vmem, size = 0x1000, scoped, tag = 'scratch operand']
  %s0 = inlined_call_operand.hbm [shape: f32[16,128], index: 0, kind: input, shape index: {}]
  %s1 = inlined_call_operand.hbm [shape: bf16[1,128,256], index: 1, kind: input, shape index: {}]
  %s2 = inlined_call_operand.vmem [shape: f32[1,1,256], index: 2, kind: input, shape index: {}]
  %s3 = inlined_call_operand.hbm [shape: f32[16,128], index: 3, kind: output, shape index: {}]
  %s4 = sld [smem:[#allocation0]]
  $region34: #{glu_block_forward.1} parent=0
    _
  %s6 = ssub.s32 1, %s4
  %s7 = scalar_select 0, %s6, %s4
  $region1: #{glu_block_forward.1} parent=0
    #allocation3 [shape = 'u8[8192]{0}', space=vmem, size = 0x2000, scoped, tag = 'input window, operand 0, single buffered']
    #allocation4 [shape = 's32[1]{0}', space=sflag, size = 0x4, scoped, tag = 'scoped memory for glu_block_forward.1']
    #allocation5 [shape = 's32[1]{0}', space=sflag, size = 0x4, scoped, tag = 'scoped memory for glu_block_forward.1']
    #allocation6 [shape = 'u8[65536]{0}', space=vmem, size = 0x10000, scoped, tag = 'input window, operand 1, single buffered']
    #allocation7 [shape = 's32[1]{0}', space=sflag, size = 0x4, scoped, tag = 'scoped memory for glu_block_forward.1']
    #allocation8 [shape = 'u8[8192]{0}', space=vmem, size = 0x2000, scoped, tag = 'output window, operand 0, single buffered']
    %8 = vsyncpa [#allocation4], 0
    %9 = vsyncpa [#allocation7], 0
    %10 = vsyncpa [#allocation5], 0
    // Predicated region
    $region2: #{glu_block_forward.1} parent=1 // pred_check
      _
    $region3: #{glu_block_forward.1} parent=1 // pred_check_branch
      %12 = sbr.rel (0) target = $region5
    $region4: #{glu_block_forward.1} parent=1 // pred_region
      %s14 = ssub.s32 256, 256
      %15 = vsyncadd [#allocation4], %s14
      %s16 = sshll.u32 [#allocation3], 4
      %s17 = int_to_ptr.vmem [resolvable:$true] %s16
      %22 = dma.hbm_to_vmem [thread:$0]  %s0, 256, %s17, [#allocation4], 128, 128, 8
    $region5: #{glu_block_forward.1} parent=1 // pred_fallthru
      _
    // Predicated region
    $region6: #{glu_block_forward.1} parent=1 // pred_check
      _
    $region7: #{glu_block_forward.1} parent=1 // pred_check_branch
      %24 = sbr.rel (0) target = $region9
    $region8: #{glu_block_forward.1} parent=1 // pred_region
      %s26 = ssub.s32 2048, 2048
      %27 = vsyncadd [#allocation7], %s26
      %s28 = sshll.u32 [#allocation6], 4
      %s29 = int_to_ptr.vmem [resolvable:$true] %s28
      %34 = dma.hbm_to_vmem [thread:$0]  %s1, 2048, %s29, [#allocation7], 128, 128, 8
    $region9: #{glu_block_forward.1} parent=1 // pred_fallthru
      _
    // Predicated region
    $region10: #{glu_block_forward.1} parent=1 // pred_check
      _
    $region11: #{glu_block_forward.1} parent=1 // pred_check_branch
      %36 = sbr.rel (0) target = $region13
    $region12: #{glu_block_forward.1} parent=1 // pred_region
      _
    $region13: #{glu_block_forward.1} parent=1 // pred_fallthru
      _
    // Predicated region
    $region14: #{glu_block_forward.1} parent=1 // pred_check
      _
    $region15: #{glu_block_forward.1} parent=1 // pred_check_branch
      %38 = sbr.rel (0) target = $region17
    $region16: #{glu_block_forward.1} parent=1 // pred_region
      %39 = dma.done [#allocation4], 256
    $region17: #{glu_block_forward.1} parent=1 // pred_fallthru
      _
    // Predicated region
    $region18: #{glu_block_forward.1} parent=1 // pred_check
      _
    $region19: #{glu_block_forward.1} parent=1 // pred_check_branch
      %41 = sbr.rel (0) target = $region21
    $region20: #{glu_block_forward.1} parent=1 // pred_region
      %42 = dma.done [#allocation7], 2048
    $region21: #{glu_block_forward.1} parent=1 // pred_fallthru
      _
    %p44 = scmp.eq.s32.totalorder 0, 0
    // Predicated region
    $region22: #{glu_block_forward.1} parent=1 // pred_check
      %p45 = pneg %p44
    $region23: #{glu_block_forward.1} parent=1 // pred_check_branch
      %47 = sbr.rel (%p45) target = $region25
    $region24: #{glu_block_forward.1} parent=1 // pred_region
      %v48 = vld [vmem:[#allocation3] sm:$0xff]
      %v49 = vld [vmem:[#allocation3 + $0x8] sm:$0xff]
      %50 = vadd.xlane.f32.xlu0 %v48
      %v51 = vpop.xlane.xlu0 %50
      %52 = vadd.xlane.f32.xlu0 %v49
      %v53 = vpop.xlane.xlu0 %52
      %v54 = vrcp.pop 128.0
      %v55 = vmul.f32 %v51, %v54
      %v56 = vmul.f32 %v53, %v54
      %v57 = vmul.f32 %v48, %v48
      %v58 = vmul.f32 %v49, %v49
      %59 = vadd.xlane.f32.xlu0 %v57
      %v60 = vpop.xlane.xlu0 %59
      %61 = vadd.xlane.f32.xlu0 %v58
      %v62 = vpop.xlane.xlu0 %61
      %v63 = vmul.f32 %v60, %v54
      %v64 = vmul.f32 %v62, %v54
      %v65 = vmul.f32 %v55, %v55
      %v66 = vmul.f32 %v56, %v56
      %v67 = vsub.f32 %v63, %v65
      %v68 = vsub.f32 %v64, %v66
      %v69 = vsub.f32 %v48, %v55
      %v70 = vsub.f32 %v49, %v56
      %v71 = vadd.f32 %v67, 1e-05
      %v72 = vadd.f32 %v68, 1e-05
      %v73 = vrsqrt.pop %v71
      %v74 = vrsqrt.pop %v72
      %v75 = vmul.f32 %v69, %v73
      %v76 = vmul.f32 %v70, %v74
      %v77 = vpack.c.bf16 %v76, %v75
      %78 = vst [vmem:[#allocation2] sm:$0xff] %v77
    $region25: #{glu_block_forward.1} parent=1 // pred_fallthru
      _
    %v79 = vld [vmem:[#allocation2] sm:$0xff]
    %v80 = vld [vmem:[#allocation6] sm:$0xff]
    %v81 = vld [vmem:[#allocation6 + $0x8] sm:$0xff]
    %v82 = vld [vmem:[#allocation6 + $0x10] sm:$0xff]
    %v83 = vld [vmem:[#allocation6 + $0x18] sm:$0xff]
    %v84 = vld [vmem:[#allocation6 + $0x20] sm:$0xff]
    %v85 = vld [vmem:[#allocation6 + $0x28] sm:$0xff]
    %v86 = vld [vmem:[#allocation6 + $0x30] sm:$0xff]
    %v87 = vld [vmem:[#allocation6 + $0x38] sm:$0xff]
    %v88 = vld [vmem:[#allocation6 + $0x40] sm:$0xff]
    %v89 = vld [vmem:[#allocation6 + $0x48] sm:$0xff]
    %v90 = vld [vmem:[#allocation6 + $0x50] sm:$0xff]
    %v91 = vld [vmem:[#allocation6 + $0x58] sm:$0xff]
    %v92 = vld [vmem:[#allocation6 + $0x60] sm:$0xff]
    %v93 = vld [vmem:[#allocation6 + $0x68] sm:$0xff]
    %v94 = vld [vmem:[#allocation6 + $0x70] sm:$0xff]
    %v95 = vld [vmem:[#allocation6 + $0x78] sm:$0xff]
    %v96 = vld [vmem:[%s2] sm:$0x3]
    %v98 = vlaneseq
    %v99 = vshrl.u32 %v98, 7
    %v100 = vsub.s32 0, %v99
    %v101 = vrot.slane %v96, %v100
    %v102 = vlaneseq
    %v103 = vshrl.u32 %v102, 7
    %v104 = vsub.s32 1, %v103
    %v105 = vrot.slane %v96, %v104
    %v124 = vunpack.c.l.b16 %v80
    %v125 = vunpack.c.h.b16 %v80
    %v126 = vunpack.c.l.b16 %v81
    %v127 = vunpack.c.h.b16 %v81
    %v128 = vunpack.c.l.b16 %v82
    %v129 = vunpack.c.h.b16 %v82
    %v130 = vunpack.c.l.b16 %v83
    %v131 = vunpack.c.h.b16 %v83
    %v132 = vunpack.c.l.b16 %v84
    %v133 = vunpack.c.h.b16 %v84
    %v134 = vunpack.c.l.b16 %v85
    %v135 = vunpack.c.h.b16 %v85
    %v136 = vunpack.c.l.b16 %v86
    %v137 = vunpack.c.h.b16 %v86
    %v138 = vunpack.c.l.b16 %v87
    %v139 = vunpack.c.h.b16 %v87
    %v140 = vunpack.c.l.b16 %v88
    %v141 = vunpack.c.h.b16 %v88
    %v142 = vunpack.c.l.b16 %v89
    %v143 = vunpack.c.h.b16 %v89
    %v144 = vunpack.c.l.b16 %v90
    %v145 = vunpack.c.h.b16 %v90
    %v146 = vunpack.c.l.b16 %v91
    %v147 = vunpack.c.h.b16 %v91
    %v148 = vunpack.c.l.b16 %v92
    %v149 = vunpack.c.h.b16 %v92
    %v150 = vunpack.c.l.b16 %v93
    %v151 = vunpack.c.h.b16 %v93
    %v152 = vunpack.c.l.b16 %v94
    %v153 = vunpack.c.h.b16 %v94
    %v154 = vunpack.c.l.b16 %v95
    %v155 = vunpack.c.h.b16 %v95
    %v156 = vpack.c.b16 %v126, %v124
    %v157 = vpack.c.b16 %v127, %v125
    %v158 = vpack.c.b16 %v130, %v128
    %v159 = vpack.c.b16 %v131, %v129
    %v160 = vpack.c.b16 %v134, %v132
    %v161 = vpack.c.b16 %v135, %v133
    %v162 = vpack.c.b16 %v138, %v136
    %v163 = vpack.c.b16 %v139, %v137
    %v164 = vpack.c.b16 %v142, %v140
    %v165 = vpack.c.b16 %v143, %v141
    %v166 = vpack.c.b16 %v146, %v144
    %v167 = vpack.c.b16 %v147, %v145
    %v168 = vpack.c.b16 %v150, %v148
    %v169 = vpack.c.b16 %v151, %v149
    %v170 = vpack.c.b16 %v154, %v152
    %v171 = vpack.c.b16 %v155, %v153
    %188 = vmatprep.subr.bf16.mxu0 %v157
    %189 = vmatpush1.bf16.msra.mxu0 %v156
    %190 = vmatprep.subr.bf16.mxu0 %v159
    %191 = vmatpush1.bf16.msra.mxu0 %v158
    %192 = vmatprep.subr.bf16.mxu0 %v161
    %193 = vmatpush1.bf16.msra.mxu0 %v160
    %194 = vmatprep.subr.bf16.mxu0 %v163
    %195 = vmatpush1.bf16.msra.mxu0 %v162
    %196 = vmatprep.subr.bf16.mxu0 %v165
    %197 = vmatpush1.bf16.msra.mxu0 %v164
    %198 = vmatprep.subr.bf16.mxu0 %v167
    %199 = vmatpush1.bf16.msra.mxu0 %v166
    %200 = vmatprep.subr.bf16.mxu0 %v169
    %201 = vmatpush1.bf16.msra.mxu0 %v168
    %202 = vmatprep.subr.bf16.mxu0 %v171
    %203 = vmatpush1.bf16.msra.mxu0 %v170
    %204 = vmatprep.subr.bf16.mxu0 0
    %205 = vmatpush1.bf16.msra.mxu0 0
    %206 = vmatprep.subr.bf16.mxu0 0
    %207 = vmatpush1.bf16.msra.mxu0 0
    %208 = vmatprep.subr.bf16.mxu0 0
    %209 = vmatpush1.bf16.msra.mxu0 0
    %210 = vmatprep.subr.bf16.mxu0 0
    %211 = vmatpush1.bf16.msra.mxu0 0
    %212 = vmatprep.subr.bf16.mxu0 0
    %213 = vmatpush1.bf16.msra.mxu0 0
    %214 = vmatprep.subr.bf16.mxu0 0
    %215 = vmatpush1.bf16.msra.mxu0 0
    %216 = vmatprep.subr.bf16.mxu0 0
    %217 = vmatpush1.bf16.msra.mxu0 0
    %218 = vmatprep.subr.bf16.mxu0 0
    %219 = vmatpush1.bf16.msra.mxu0 0
    %220 = vmatprep.mubr.bf16.mxu0 0
    %221 = vmatmul.mubr.bf16.gmra.mrb[0].mxu0 %v79
    %v222 = vpop.f32.mrb[0].mxu0
    %v223 = vadd.f32 %v101, %v222
    %v224 = vpop.f32.mrb[0].mxu0
    %v225 = vadd.f32 %v105, %v224
    %v226 = vpop.f32.mrb[0].mxu0
    %v227 = vadd.f32 %v101, %v226
    %v228 = vpop.f32.mrb[0].mxu0
    %v229 = vadd.f32 %v105, %v228
    %230 = vdwg.mxu0
    %s231 = smul.u32 0, 128
    %s232 = sshra.s32 %s231, 7
    %s233 = sand.u32 %s231, 127
    %s234 = scalar_lea.vmem [#allocation3], %s232
    %v235 = vld [vmem:[%s234] sm:$0xff]
    %v236 = vld [vmem:[%s234 + $0x8] sm:$0xff]
    %v237 = vxor.u32 %v225, 2147483648
    %v238 = vxor.u32 %v229, 2147483648
    %v239 = vmul.f32 %v237, 1.442695
    %v240 = vpow.pop %v239
    %v241 = vmul.f32 %v238, 1.442695
    %v242 = vpow.pop %v241
    %v243 = vadd.f32 %v240, 1.0
    %v244 = vadd.f32 %v242, 1.0
    %v245 = vrcp.pop %v243
    %v246 = vmul.f32 1.0, %v245
    %v247 = vrcp.pop %v244
    %v248 = vmul.f32 1.0, %v247
    %v249 = vmul.f32 %v223, %v246
    %v250 = vmul.f32 %v227, %v248
    %v251 = vadd.f32 %v235, %v249
    %v252 = vadd.f32 %v236, %v250
    %253 = vst [vmem:[#allocation8] sm:$0xff] %v251
    %254 = vst [vmem:[#allocation8 + $0x8] sm:$0xff] %v252
    // Predicated region
    $region26: #{glu_block_forward.1} parent=1 // pred_check
      _
    $region27: #{glu_block_forward.1} parent=1 // pred_check_branch
      %256 = sbr.rel (0) target = $region29
    $region28: #{glu_block_forward.1} parent=1 // pred_region
      %s258 = ssub.s32 256, 256
      %259 = vsyncadd [#allocation5], %s258
      %s260 = sshll.u32 [#allocation8], 4
      %s261 = int_to_ptr.vmem [resolvable:$true] %s260
      %266 = dma.vmem_to_hbm [thread:$0]  %s261, 256, %s3, [#allocation5], 128, 128, 8
    $region29: #{glu_block_forward.1} parent=1 // pred_fallthru
      _
    // Predicated region
    $region30: #{glu_block_forward.1} parent=1 // pred_check
      _
    $region31: #{glu_block_forward.1} parent=1 // pred_check_branch
      %268 = sbr.rel (0) target = $region33
    $region32: #{glu_block_forward.1} parent=1 // pred_region
      %269 = dma.done [#allocation5], 256
    $region33: #{glu_block_forward.1} parent=1 // pred_fallthru
      _
    %270 = vsyncpa [#allocation4], 1
    %271 = vsyncpa [#allocation7], 1
    %272 = vsyncpa [#allocation5], 1

</llo_original>
